<compile_context>
chip_gen: v7x
topology: tpu7x:2x2x1
jax: 0.10.0
libtpu: 0.0.40
codegen_flags: <defaults>
</compile_context>

<pallas_src>
import math

import numpy as np
import jax
import jax.numpy as jnp
from jax.experimental import pallas as pl
from jax.experimental.pallas import tpu as pltpu


def _make_kernel(C, H, W, eps=1e-5):
    HW = H * W
    PAD = 128                      # lane-aligned zero pad; must be >= W + 1
    assert W + 1 <= PAD, "kernel assumes W <= 127"

    def kernel(coords_ref, x_ref, w1_ref, b1_ref, w2_ref, b2_ref, out_ref):
        x = x_ref[0]                                              # (C, HW) channels-first

        # Per-pixel (row, col) indices, broadcast once (hoisted out of all loops).
        y_idx = jnp.broadcast_to(coords_ref[0:1, :], (C, HW))     # int32 (C, HW)
        x_idx = jnp.broadcast_to(coords_ref[1:2, :], (C, HW))

        # Reflection boundary masks, shared by both convolutions.
        y_ok = {o: (y_idx + o >= 0) & (y_idx + o <= H - 1) for o in (-1, 1)}
        x_ok = {o: (x_idx + o >= 0) & (x_idx + o <= W - 1) for o in (-1, 1)}

        zpad = jnp.zeros((C, PAD), jnp.float32)

        def conv3x3_reflect(act, w_ref, b_ref):
            # Zero-pad the flattened spatial axis so every shifted window is an
            # in-bounds *static* slice.  All concat pieces are 128-lane aligned.
            padded = jnp.concatenate([zpad, act, zpad], axis=1)   # (C, HW + 2*PAD)

            # window(a, b)[c, y*W + x] == act[c, y*W + x + a*W + b]  (zeros off the ends)
            win = {(a, b): padded[:, PAD + a * W + b: PAD + a * W + b + HW]
                   for a in (-1, 0, 1) for b in (-1, 0, 1)}

            taps = []
            for dy in range(3):
                o = dy - 1
                for dx in range(3):
                    ox = dx - 1
                    # desired value: act_2d[c, reflect(y+o), reflect(x+ox)]
                    if o == 0 and ox == 0:
                        tap = win[(0, 0)]
                    elif o == 0:
                        tap = jnp.where(x_ok[ox], win[(0, ox)], win[(0, -ox)])
                    elif ox == 0:
                        tap = jnp.where(y_ok[o], win[(o, 0)], win[(-o, 0)])
                    else:
                        tap = jnp.where(
                            y_ok[o],
                            jnp.where(x_ok[ox], win[(o, ox)], win[(o, -ox)]),
                            jnp.where(x_ok[ox], win[(-o, ox)], win[(-o, -ox)]))
                    taps.append(tap)

            # im2col: (9C, HW); sublane-aligned concat (C is a multiple of 8).
            a = jnp.concatenate(taps, axis=0)
            # One fat MXU matmul per conv: (C, 9C) @ (9C, HW) -> (C, HW), lane-dense.
            y = jnp.dot(w_ref[...], a, preferred_element_type=jnp.float32)
            return y + b_ref[...]                                 # (C, 1) broadcasts over lanes

        def inorm(y):
            # InstanceNorm2d(affine=False): per-channel stats over HW, one pass.
            inv_n = 1.0 / HW
            s = jnp.sum(y, axis=1, keepdims=True)
            ss = jnp.sum(y * y, axis=1, keepdims=True)
            mean = s * inv_n
            var = ss * inv_n - mean * mean                        # biased variance
            return (y - mean) * jax.lax.rsqrt(var + eps)

        y1 = jnp.maximum(inorm(conv3x3_reflect(x, w1_ref, b1_ref)), 0.0)
        y2 = inorm(conv3x3_reflect(y1, w2_ref, b2_ref))
        out_ref[0] = x + y2                                       # skip connection, dense store

    return kernel


def resnet_block_pallas(x, params, eps=1e-5):
    """x: (B, C, H, W) float32 (torch NCHW convention)."""
    B, C, H, W = x.shape
    HW = H * W
    assert H >= 2 and W >= 2, "ReflectionPad2d(1) needs H, W >= 2"
    assert C % 8 == 0, "channel count must be a multiple of 8"
    # TODO(synk): support H*W that is not a multiple of 128 (needs an unaligned pad path).
    assert HW % 128 == 0, "flattened spatial extent must be a multiple of 128"

    # Free metadata reshape (no HBM transpose): NCHW -> (B, C, HW).
    x_flat = x.reshape(B, C, HW)

    # Conv weights (C_out, C_in, 3, 3) -> (C_out, 9*C_in), matching the im2col row
    # order (tap-major, then input channel).  Cross-correlation, like nn.Conv2d.
    w1 = params["w1"].transpose(0, 2, 3, 1).reshape(C, 9 * C)
    w2 = params["w2"].transpose(0, 2, 3, 1).reshape(C, 9 * C)
    b1 = params["b1"].reshape(C, 1)
    b2 = params["b2"].reshape(C, 1)

    # Per-pixel (row, col) indices for the in-kernel reflection masks (constant).
    yy, xx = np.meshgrid(np.arange(H, dtype=np.int32),
                         np.arange(W, dtype=np.int32), indexing="ij")
    coords = jnp.asarray(np.stack([yy.reshape(-1), xx.reshape(-1)], axis=0))   # (2, HW)

    kernel = _make_kernel(C, H, W, eps)

    out_flat = pl.pallas_call(
        kernel,
        grid=(B,),
        in_specs=[
            pl.BlockSpec((2, HW), lambda b: (0, 0)),
            pl.BlockSpec((1, C, HW), lambda b: (b, 0, 0)),
            pl.BlockSpec((C, 9 * C), lambda b: (0, 0)),
            pl.BlockSpec((C, 1), lambda b: (0, 0)),
            pl.BlockSpec((C, 9 * C), lambda b: (0, 0)),
            pl.BlockSpec((C, 1), lambda b: (0, 0)),
        ],
        out_specs=pl.BlockSpec((1, C, HW), lambda b: (b, 0, 0)),
        out_shape=jax.ShapeDtypeStruct((B, C, HW), jnp.float32),
        compiler_params=pltpu.CompilerParams(dimension_semantics=("parallel",)),
    )(coords, x_flat, w1, b1, w2, b2)

    return out_flat.reshape(B, C, H, W)


def resnet_block_reference(x, params, eps=1e-5):
    """Pure-JAX reference with identical semantics (for validation)."""
    def conv3x3_reflect(y, w, b):
        yp = jnp.pad(y, ((0, 0), (0, 0), (1, 1), (1, 1)), mode="reflect")
        out = jax.lax.conv_general_dilated(
            yp, w, window_strides=(1, 1), padding="VALID",
            dimension_numbers=("NCHW", "OIHW", "NCHW"))
        return out + b.reshape(1, -1, 1, 1)

    def inorm(y):
        mean = jnp.mean(y, axis=(2, 3), keepdims=True)
        var = jnp.mean((y - mean) ** 2, axis=(2, 3), keepdims=True)
        return (y - mean) / jnp.sqrt(var + eps)

    y = jax.nn.relu(inorm(conv3x3_reflect(x, params["w1"], params["b1"])))
    y = inorm(conv3x3_reflect(y, params["w2"], params["b2"]))
    return x + y


def init_params(key, dim):
    ks = jax.random.split(key, 4)
    bound = 1.0 / math.sqrt(dim * 9)
    f32 = jnp.float32
    return {
        "w1": jax.random.uniform(ks[0], (dim, dim, 3, 3), f32, -bound, bound),
        "b1": jax.random.uniform(ks[1], (dim,), f32, -bound, bound),
        "w2": jax.random.uniform(ks[2], (dim, dim, 3, 3), f32, -bound, bound),
        "b2": jax.random.uniform(ks[3], (dim,), f32, -bound, bound),
    }


if __name__ == "__main__":
    B, dim, H, W = 2, 16, 16, 16

    key = jax.random.PRNGKey(0)
    kx, kp = jax.random.split(key)
    x = jax.random.normal(kx, (B, dim, H, W), jnp.float32)
    params = init_params(kp, dim)

    out = resnet_block_pallas(x, params)
    jax.block_until_ready(out)

    ref = resnet_block_reference(x, params)
    np.testing.assert_allclose(np.asarray(out), np.asarray(ref), rtol=1e-4, atol=1e-4)

    print("KERNEL_OK")
</pallas_src>

<mosaic_0001>
module attributes {stable_mosaic.version = 11 : i64} {
  func.func @kernel(%arg0: i32, %arg1: memref<2x256xi32, #tpu.memory_space<vmem>>, %arg2: memref<1x16x256xf32, #tpu.memory_space<vmem>>, %arg3: memref<16x144xf32, #tpu.memory_space<vmem>>, %arg4: memref<16x1xf32, #tpu.memory_space<vmem>>, %arg5: memref<16x144xf32, #tpu.memory_space<vmem>>, %arg6: memref<16x1xf32, #tpu.memory_space<vmem>>, %arg7: memref<1x16x256xf32, #tpu.memory_space<vmem>>) attributes {dimension_semantics = [#tpu.dimension_semantics<parallel>], iteration_bounds = array<i64: 2>, scalar_prefetch = 0 : i64, scratch_operands = 0 : i64, tpu.core_type = #tpu.core_type<tc>, window_params = [{pipeline_mode = #tpu.pipeline_mode<synchronous>, transform_indices = @transform_0, window_bounds = array<i64: 2, 256>}, {transform_indices = @transform_1, window_bounds = array<i64: 1, 16, 256>}, {pipeline_mode = #tpu.pipeline_mode<synchronous>, transform_indices = @transform_2, window_bounds = array<i64: 16, 144>}, {pipeline_mode = #tpu.pipeline_mode<synchronous>, transform_indices = @transform_3, window_bounds = array<i64: 16, 1>}, {pipeline_mode = #tpu.pipeline_mode<synchronous>, transform_indices = @transform_4, window_bounds = array<i64: 16, 144>}, {pipeline_mode = #tpu.pipeline_mode<synchronous>, transform_indices = @transform_5, window_bounds = array<i64: 16, 1>}, {transform_indices = @transform_6, window_bounds = array<i64: 1, 16, 256>}]} {
    %c0 = arith.constant 0 : index
    %c0_0 = arith.constant 0 : index
    %c0_1 = arith.constant 0 : index
    %0 = vector.load %arg2[%c0, %c0_0, %c0_1] : memref<1x16x256xf32, #tpu.memory_space<vmem>>, vector<1x16x256xf32>
    %1 = vector.shape_cast %0 : vector<1x16x256xf32> to vector<16x256xf32>
    %c0_2 = arith.constant 0 : index
    %c0_3 = arith.constant 0 : index
    %2 = vector.load %arg1[%c0_2, %c0_3] : memref<2x256xi32, #tpu.memory_space<vmem>>, vector<1x256xi32>
    %3 = vector.shape_cast %2 : vector<1x256xi32> to vector<1x256xi32>
    %4 = vector.broadcast %3 : vector<1x256xi32> to vector<16x256xi32>
    %c1 = arith.constant 1 : index
    %c0_4 = arith.constant 0 : index
    %5 = vector.load %arg1[%c1, %c0_4] : memref<2x256xi32, #tpu.memory_space<vmem>>, vector<1x256xi32>
    %6 = vector.shape_cast %5 : vector<1x256xi32> to vector<1x256xi32>
    %7 = vector.broadcast %6 : vector<1x256xi32> to vector<16x256xi32>
    %c-1_i32 = arith.constant -1 : i32
    %8 = vector.broadcast %c-1_i32 : i32 to vector<16x256xi32>
    %9 = arith.addi %4, %8 : vector<16x256xi32>
    %c0_i32 = arith.constant 0 : i32
    %10 = vector.broadcast %c0_i32 : i32 to vector<16x256xi32>
    %11 = arith.cmpi sge, %9, %10 : vector<16x256xi32>
    %c-1_i32_5 = arith.constant -1 : i32
    %12 = vector.broadcast %c-1_i32_5 : i32 to vector<16x256xi32>
    %13 = arith.addi %4, %12 : vector<16x256xi32>
    %c15_i32 = arith.constant 15 : i32
    %14 = vector.broadcast %c15_i32 : i32 to vector<16x256xi32>
    %15 = arith.cmpi sle, %13, %14 : vector<16x256xi32>
    %16 = arith.andi %11, %15 : vector<16x256xi1>
    %c1_i32 = arith.constant 1 : i32
    %17 = vector.broadcast %c1_i32 : i32 to vector<16x256xi32>
    %18 = arith.addi %4, %17 : vector<16x256xi32>
    %c0_i32_6 = arith.constant 0 : i32
    %19 = vector.broadcast %c0_i32_6 : i32 to vector<16x256xi32>
    %20 = arith.cmpi sge, %18, %19 : vector<16x256xi32>
    %c1_i32_7 = arith.constant 1 : i32
    %21 = vector.broadcast %c1_i32_7 : i32 to vector<16x256xi32>
    %22 = arith.addi %4, %21 : vector<16x256xi32>
    %c15_i32_8 = arith.constant 15 : i32
    %23 = vector.broadcast %c15_i32_8 : i32 to vector<16x256xi32>
    %24 = arith.cmpi sle, %22, %23 : vector<16x256xi32>
    %25 = arith.andi %20, %24 : vector<16x256xi1>
    %c-1_i32_9 = arith.constant -1 : i32
    %26 = vector.broadcast %c-1_i32_9 : i32 to vector<16x256xi32>
    %27 = arith.addi %7, %26 : vector<16x256xi32>
    %c0_i32_10 = arith.constant 0 : i32
    %28 = vector.broadcast %c0_i32_10 : i32 to vector<16x256xi32>
    %29 = arith.cmpi sge, %27, %28 : vector<16x256xi32>
    %c-1_i32_11 = arith.constant -1 : i32
    %30 = vector.broadcast %c-1_i32_11 : i32 to vector<16x256xi32>
    %31 = arith.addi %7, %30 : vector<16x256xi32>
    %c15_i32_12 = arith.constant 15 : i32
    %32 = vector.broadcast %c15_i32_12 : i32 to vector<16x256xi32>
    %33 = arith.cmpi sle, %31, %32 : vector<16x256xi32>
    %34 = arith.andi %29, %33 : vector<16x256xi1>
    %c1_i32_13 = arith.constant 1 : i32
    %35 = vector.broadcast %c1_i32_13 : i32 to vector<16x256xi32>
    %36 = arith.addi %7, %35 : vector<16x256xi32>
    %c0_i32_14 = arith.constant 0 : i32
    %37 = vector.broadcast %c0_i32_14 : i32 to vector<16x256xi32>
    %38 = arith.cmpi sge, %36, %37 : vector<16x256xi32>
    %c1_i32_15 = arith.constant 1 : i32
    %39 = vector.broadcast %c1_i32_15 : i32 to vector<16x256xi32>
    %40 = arith.addi %7, %39 : vector<16x256xi32>
    %c15_i32_16 = arith.constant 15 : i32
    %41 = vector.broadcast %c15_i32_16 : i32 to vector<16x256xi32>
    %42 = arith.cmpi sle, %40, %41 : vector<16x256xi32>
    %43 = arith.andi %38, %42 : vector<16x256xi1>
    %cst = arith.constant 0.000000e+00 : f32
    %44 = vector.broadcast %cst : f32 to vector<16x128xf32>
    %45 = tpu.concatenate %44, %1, %44 in 1 : vector<16x128xf32>, vector<16x256xf32>, vector<16x128xf32> -> vector<16x512xf32>
    %46 = vector.extract_strided_slice %45 {offsets = [0, 111], sizes = [16, 256], strides = [1, 1]} : vector<16x512xf32> to vector<16x256xf32>
    %47 = vector.extract_strided_slice %45 {offsets = [0, 112], sizes = [16, 256], strides = [1, 1]} : vector<16x512xf32> to vector<16x256xf32>
    %48 = vector.extract_strided_slice %45 {offsets = [0, 113], sizes = [16, 256], strides = [1, 1]} : vector<16x512xf32> to vector<16x256xf32>
    %49 = vector.extract_strided_slice %45 {offsets = [0, 127], sizes = [16, 256], strides = [1, 1]} : vector<16x512xf32> to vector<16x256xf32>
    %50 = vector.extract_strided_slice %45 {offsets = [0, 128], sizes = [16, 256], strides = [1, 1]} : vector<16x512xf32> to vector<16x256xf32>
    %51 = vector.extract_strided_slice %45 {offsets = [0, 129], sizes = [16, 256], strides = [1, 1]} : vector<16x512xf32> to vector<16x256xf32>
    %52 = vector.extract_strided_slice %45 {offsets = [0, 143], sizes = [16, 256], strides = [1, 1]} : vector<16x512xf32> to vector<16x256xf32>
    %53 = vector.extract_strided_slice %45 {offsets = [0, 144], sizes = [16, 256], strides = [1, 1]} : vector<16x512xf32> to vector<16x256xf32>
    %54 = vector.extract_strided_slice %45 {offsets = [0, 145], sizes = [16, 256], strides = [1, 1]} : vector<16x512xf32> to vector<16x256xf32>
    %55 = arith.select %34, %46, %48 : vector<16x256xi1>, vector<16x256xf32>
    %56 = arith.select %34, %52, %54 : vector<16x256xi1>, vector<16x256xf32>
    %57 = arith.select %16, %55, %56 : vector<16x256xi1>, vector<16x256xf32>
    %58 = arith.select %16, %47, %53 : vector<16x256xi1>, vector<16x256xf32>
    %59 = arith.select %43, %48, %46 : vector<16x256xi1>, vector<16x256xf32>
    %60 = arith.select %43, %54, %52 : vector<16x256xi1>, vector<16x256xf32>
    %61 = arith.select %16, %59, %60 : vector<16x256xi1>, vector<16x256xf32>
    %62 = arith.select %34, %49, %51 : vector<16x256xi1>, vector<16x256xf32>
    %63 = arith.select %43, %51, %49 : vector<16x256xi1>, vector<16x256xf32>
    %64 = arith.select %34, %52, %54 : vector<16x256xi1>, vector<16x256xf32>
    %65 = arith.select %34, %46, %48 : vector<16x256xi1>, vector<16x256xf32>
    %66 = arith.select %25, %64, %65 : vector<16x256xi1>, vector<16x256xf32>
    %67 = arith.select %25, %53, %47 : vector<16x256xi1>, vector<16x256xf32>
    %68 = arith.select %43, %54, %52 : vector<16x256xi1>, vector<16x256xf32>
    %69 = arith.select %43, %48, %46 : vector<16x256xi1>, vector<16x256xf32>
    %70 = arith.select %25, %68, %69 : vector<16x256xi1>, vector<16x256xf32>
    %71 = tpu.concatenate %57, %58, %61, %62, %50, %63, %66, %67, %70 in 0 : vector<16x256xf32>, vector<16x256xf32>, vector<16x256xf32>, vector<16x256xf32>, vector<16x256xf32>, vector<16x256xf32>, vector<16x256xf32>, vector<16x256xf32>, vector<16x256xf32> -> vector<144x256xf32>
    %c0_17 = arith.constant 0 : index
    %c0_18 = arith.constant 0 : index
    %72 = vector.load %arg3[%c0_17, %c0_18] : memref<16x144xf32, #tpu.memory_space<vmem>>, vector<16x144xf32>
    %cst_19 = arith.constant dense<0.000000e+00> : vector<16x256xf32>
    %73 = tpu.matmul %72, %71, %cst_19 {dimension_numbers = #tpu.dot_dimension_numbers<[1], [0], [0], [1], [0, 0, 1, 1], [], []>} : vector<16x144xf32>, vector<144x256xf32>, vector<16x256xf32> -> vector<16x256xf32>
    %c0_20 = arith.constant 0 : index
    %c0_21 = arith.constant 0 : index
    %74 = vector.load %arg4[%c0_20, %c0_21] : memref<16x1xf32, #tpu.memory_space<vmem>>, vector<16x1xf32>
    %75 = vector.broadcast %74 : vector<16x1xf32> to vector<16x256xf32>
    %76 = arith.addf %73, %75 : vector<16x256xf32>
    %cst_22 = arith.constant dense<0.000000e+00> : vector<16xf32>
    %77 = vector.multi_reduction <add>, %76, %cst_22 [1] : vector<16x256xf32> to vector<16xf32>
    %78 = vector.shape_cast %77 : vector<16xf32> to vector<16x1xf32>
    %79 = arith.mulf %76, %76 : vector<16x256xf32>
    %cst_23 = arith.constant dense<0.000000e+00> : vector<16xf32>
    %80 = vector.multi_reduction <add>, %79, %cst_23 [1] : vector<16x256xf32> to vector<16xf32>
    %81 = vector.shape_cast %80 : vector<16xf32> to vector<16x1xf32>
    %cst_24 = arith.constant 3.906250e-03 : f32
    %82 = vector.broadcast %cst_24 : f32 to vector<16x1xf32>
    %83 = arith.mulf %78, %82 : vector<16x1xf32>
    %cst_25 = arith.constant 3.906250e-03 : f32
    %84 = vector.broadcast %cst_25 : f32 to vector<16x1xf32>
    %85 = arith.mulf %81, %84 : vector<16x1xf32>
    %86 = arith.mulf %83, %83 : vector<16x1xf32>
    %87 = arith.subf %85, %86 : vector<16x1xf32>
    %88 = vector.broadcast %83 : vector<16x1xf32> to vector<16x256xf32>
    %89 = arith.subf %76, %88 : vector<16x256xf32>
    %cst_26 = arith.constant 9.99999974E-6 : f32
    %90 = vector.broadcast %cst_26 : f32 to vector<16x1xf32>
    %91 = arith.addf %87, %90 : vector<16x1xf32>
    %92 = math.rsqrt %91 : vector<16x1xf32>
    %93 = vector.broadcast %92 : vector<16x1xf32> to vector<16x256xf32>
    %94 = arith.mulf %89, %93 : vector<16x256xf32>
    %cst_27 = arith.constant 0.000000e+00 : f32
    %95 = vector.broadcast %cst_27 : f32 to vector<16x256xf32>
    %96 = arith.maximumf %94, %95 : vector<16x256xf32>
    %97 = tpu.concatenate %44, %96, %44 in 1 : vector<16x128xf32>, vector<16x256xf32>, vector<16x128xf32> -> vector<16x512xf32>
    %98 = vector.extract_strided_slice %97 {offsets = [0, 111], sizes = [16, 256], strides = [1, 1]} : vector<16x512xf32> to vector<16x256xf32>
    %99 = vector.extract_strided_slice %97 {offsets = [0, 112], sizes = [16, 256], strides = [1, 1]} : vector<16x512xf32> to vector<16x256xf32>
    %100 = vector.extract_strided_slice %97 {offsets = [0, 113], sizes = [16, 256], strides = [1, 1]} : vector<16x512xf32> to vector<16x256xf32>
    %101 = vector.extract_strided_slice %97 {offsets = [0, 127], sizes = [16, 256], strides = [1, 1]} : vector<16x512xf32> to vector<16x256xf32>
    %102 = vector.extract_strided_slice %97 {offsets = [0, 128], sizes = [16, 256], strides = [1, 1]} : vector<16x512xf32> to vector<16x256xf32>
    %103 = vector.extract_strided_slice %97 {offsets = [0, 129], sizes = [16, 256], strides = [1, 1]} : vector<16x512xf32> to vector<16x256xf32>
    %104 = vector.extract_strided_slice %97 {offsets = [0, 143], sizes = [16, 256], strides = [1, 1]} : vector<16x512xf32> to vector<16x256xf32>
    %105 = vector.extract_strided_slice %97 {offsets = [0, 144], sizes = [16, 256], strides = [1, 1]} : vector<16x512xf32> to vector<16x256xf32>
    %106 = vector.extract_strided_slice %97 {offsets = [0, 145], sizes = [16, 256], strides = [1, 1]} : vector<16x512xf32> to vector<16x256xf32>
    %107 = arith.select %34, %98, %100 : vector<16x256xi1>, vector<16x256xf32>
    %108 = arith.select %34, %104, %106 : vector<16x256xi1>, vector<16x256xf32>
    %109 = arith.select %16, %107, %108 : vector<16x256xi1>, vector<16x256xf32>
    %110 = arith.select %16, %99, %105 : vector<16x256xi1>, vector<16x256xf32>
    %111 = arith.select %43, %100, %98 : vector<16x256xi1>, vector<16x256xf32>
    %112 = arith.select %43, %106, %104 : vector<16x256xi1>, vector<16x256xf32>
    %113 = arith.select %16, %111, %112 : vector<16x256xi1>, vector<16x256xf32>
    %114 = arith.select %34, %101, %103 : vector<16x256xi1>, vector<16x256xf32>
    %115 = arith.select %43, %103, %101 : vector<16x256xi1>, vector<16x256xf32>
    %116 = arith.select %34, %104, %106 : vector<16x256xi1>, vector<16x256xf32>
    %117 = arith.select %34, %98, %100 : vector<16x256xi1>, vector<16x256xf32>
    %118 = arith.select %25, %116, %117 : vector<16x256xi1>, vector<16x256xf32>
    %119 = arith.select %25, %105, %99 : vector<16x256xi1>, vector<16x256xf32>
    %120 = arith.select %43, %106, %104 : vector<16x256xi1>, vector<16x256xf32>
    %121 = arith.select %43, %100, %98 : vector<16x256xi1>, vector<16x256xf32>
    %122 = arith.select %25, %120, %121 : vector<16x256xi1>, vector<16x256xf32>
    %123 = tpu.concatenate %109, %110, %113, %114, %102, %115, %118, %119, %122 in 0 : vector<16x256xf32>, vector<16x256xf32>, vector<16x256xf32>, vector<16x256xf32>, vector<16x256xf32>, vector<16x256xf32>, vector<16x256xf32>, vector<16x256xf32>, vector<16x256xf32> -> vector<144x256xf32>
    %c0_28 = arith.constant 0 : index
    %c0_29 = arith.constant 0 : index
    %124 = vector.load %arg5[%c0_28, %c0_29] : memref<16x144xf32, #tpu.memory_space<vmem>>, vector<16x144xf32>
    %cst_30 = arith.constant dense<0.000000e+00> : vector<16x256xf32>
    %125 = tpu.matmul %124, %123, %cst_30 {dimension_numbers = #tpu.dot_dimension_numbers<[1], [0], [0], [1], [0, 0, 1, 1], [], []>} : vector<16x144xf32>, vector<144x256xf32>, vector<16x256xf32> -> vector<16x256xf32>
    %c0_31 = arith.constant 0 : index
    %c0_32 = arith.constant 0 : index
    %126 = vector.load %arg6[%c0_31, %c0_32] : memref<16x1xf32, #tpu.memory_space<vmem>>, vector<16x1xf32>
    %127 = vector.broadcast %126 : vector<16x1xf32> to vector<16x256xf32>
    %128 = arith.addf %125, %127 : vector<16x256xf32>
    %cst_33 = arith.constant dense<0.000000e+00> : vector<16xf32>
    %129 = vector.multi_reduction <add>, %128, %cst_33 [1] : vector<16x256xf32> to vector<16xf32>
    %130 = vector.shape_cast %129 : vector<16xf32> to vector<16x1xf32>
    %131 = arith.mulf %128, %128 : vector<16x256xf32>
    %cst_34 = arith.constant dense<0.000000e+00> : vector<16xf32>
    %132 = vector.multi_reduction <add>, %131, %cst_34 [1] : vector<16x256xf32> to vector<16xf32>
    %133 = vector.shape_cast %132 : vector<16xf32> to vector<16x1xf32>
    %cst_35 = arith.constant 3.906250e-03 : f32
    %134 = vector.broadcast %cst_35 : f32 to vector<16x1xf32>
    %135 = arith.mulf %130, %134 : vector<16x1xf32>
    %cst_36 = arith.constant 3.906250e-03 : f32
    %136 = vector.broadcast %cst_36 : f32 to vector<16x1xf32>
    %137 = arith.mulf %133, %136 : vector<16x1xf32>
    %138 = arith.mulf %135, %135 : vector<16x1xf32>
    %139 = arith.subf %137, %138 : vector<16x1xf32>
    %140 = vector.broadcast %135 : vector<16x1xf32> to vector<16x256xf32>
    %141 = arith.subf %128, %140 : vector<16x256xf32>
    %cst_37 = arith.constant 9.99999974E-6 : f32
    %142 = vector.broadcast %cst_37 : f32 to vector<16x1xf32>
    %143 = arith.addf %139, %142 : vector<16x1xf32>
    %144 = math.rsqrt %143 : vector<16x1xf32>
    %145 = vector.broadcast %144 : vector<16x1xf32> to vector<16x256xf32>
    %146 = arith.mulf %141, %145 : vector<16x256xf32>
    %147 = arith.addf %1, %146 : vector<16x256xf32>
    %c0_38 = arith.constant 0 : index
    %c0_39 = arith.constant 0 : index
    %c0_40 = arith.constant 0 : index
    %148 = vector.load %arg7[%c0_38, %c0_39, %c0_40] : memref<1x16x256xf32, #tpu.memory_space<vmem>>, vector<1x16x256xf32>
    %149 = vector.shape_cast %148 : vector<1x16x256xf32> to vector<16x256xf32>
    %150 = vector.shape_cast %147 : vector<16x256xf32> to vector<1x16x256xf32>
    tpu.vector_store %arg7[%c0_38, %c0_39, %c0_40], %150 {strides = array<i32>} : memref<1x16x256xf32, #tpu.memory_space<vmem>>, vector<1x16x256xf32>,
    return
  }
  func.func @transform_0(%arg0: i32) -> (i32, i32) {
    %c0_i32 = arith.constant 0 : i32
    %c0_i32_0 = arith.constant 0 : i32
    %c0_i32_1 = arith.constant 0 : i32
    return %c0_i32, %c0_i32_0 : i32, i32
  }
  func.func @transform_1(%arg0: i32) -> (i32, i32, i32) {
    %c0_i32 = arith.constant 0 : i32
    %c0_i32_0 = arith.constant 0 : i32
    %c0_i32_1 = arith.constant 0 : i32
    return %arg0, %c0_i32, %c0_i32_0 : i32, i32, i32
  }
  func.func @transform_2(%arg0: i32) -> (i32, i32) {
    %c0_i32 = arith.constant 0 : i32
    %c0_i32_0 = arith.constant 0 : i32
    %c0_i32_1 = arith.constant 0 : i32
    return %c0_i32, %c0_i32_0 : i32, i32
  }
  func.func @transform_3(%arg0: i32) -> (i32, i32) {
    %c0_i32 = arith.constant 0 : i32
    %c0_i32_0 = arith.constant 0 : i32
    %c0_i32_1 = arith.constant 0 : i32
    return %c0_i32, %c0_i32_0 : i32, i32
  }
  func.func @transform_4(%arg0: i32) -> (i32, i32) {
    %c0_i32 = arith.constant 0 : i32
    %c0_i32_0 = arith.constant 0 : i32
    %c0_i32_1 = arith.constant 0 : i32
    return %c0_i32, %c0_i32_0 : i32, i32
  }
  func.func @transform_5(%arg0: i32) -> (i32, i32) {
    %c0_i32 = arith.constant 0 : i32
    %c0_i32_0 = arith.constant 0 : i32
    %c0_i32_1 = arith.constant 0 : i32
    return %c0_i32, %c0_i32_0 : i32, i32
  }
  func.func @transform_6(%arg0: i32) -> (i32, i32, i32) {
    %c0_i32 = arith.constant 0 : i32
    %c0_i32_0 = arith.constant 0 : i32
    %c0_i32_1 = arith.constant 0 : i32
    return %arg0, %c0_i32, %c0_i32_0 : i32, i32, i32
  }
}

</mosaic_0001>

<llo_original>
// kernel: tpu_custom_call.1
$region0: #{tpu_custom_call.1}
  #allocation0 [shape = 'u32[]', space=smem, size = 0x4, offset = 0x4, fixed_abs, tag = 'smem constant byte address 0x4 - core index']
  #allocation1 [shape = 'u32[144,128]{1,0:T(1,128)}', space=vmem, size = 0x12000, scoped, tag = 'internal scratch']
  %s0 = inlined_call_operand.vmem [shape: s32[2,256], index: 0, kind: input, shape index: {}]
  %s1 = inlined_call_operand.hbm [shape: f32[2,16,256], index: 1, kind: input, shape index: {}]
  %s2 = inlined_call_operand.vmem [shape: f32[16,144], index: 2, kind: input, shape index: {}]
  %s3 = inlined_call_operand.vmem [shape: f32[16,1], index: 3, kind: input, shape index: {}]
  %s4 = inlined_call_operand.hbm [shape: f32[16,144], index: 4, kind: input, shape index: {}]
  %s5 = inlined_call_operand.vmem [shape: f32[16,1], index: 5, kind: input, shape index: {}]
  %s6 = inlined_call_operand.hbm [shape: f32[2,16,256], index: 6, kind: output, shape index: {}]
  %s7 = sld [smem:[#allocation0]]
  $region65: #{tpu_custom_call.1} parent=0
    _
  %s9 = ssub.s32 1, %s7
  %s10 = scalar_select 0, %s9, %s7
  $region1: #{tpu_custom_call.1} parent=0
    #allocation2 [shape = 'u8[32768]{0}', space=vmem, size = 0x8000, scoped, tag = 'input window, operand 1']
    #allocation3 [shape = 's32[2]{0}', space=sflag, size = 0x8, scoped, tag = 'scoped memory for tpu_custom_call.1']
    #allocation4 [shape = 's32[2]{0}', space=sflag, size = 0x8, scoped, tag = 'scoped memory for tpu_custom_call.1']
    #allocation5 [shape = 'u8[16384]{0}', space=vmem, size = 0x4000, scoped, tag = 'input window, operand 4, single buffered']
    #allocation6 [shape = 's32[1]{0}', space=sflag, size = 0x4, scoped, tag = 'scoped memory for tpu_custom_call.1']
    #allocation7 [shape = 'u8[32768]{0}', space=vmem, size = 0x8000, scoped, tag = 'output window, operand 0']
    %11 = vsyncpa [#allocation3], 0
    %s12 = scalar_lea.sflag [#allocation3], 1
    %13 = vsyncpa %s12, 0
    %14 = vsyncpa [#allocation6], 0
    %15 = vsyncpa [#allocation4], 0
    %s16 = scalar_lea.sflag [#allocation4], 1
    %17 = vsyncpa %s16, 0
    loop: start=0, step=1, limit=4
    $region2: #{tpu_custom_call.1} parent=1 // loop_pre_header
      _
    $region3: #{tpu_custom_call.1} parent=1 // loop_header
      %s19 = sphi 0, %s23
      %p20 = scmp.ge.s32.totalorder %s19, 4
      %s27 = sphi 0, %s27
      %s29 = sphi 0, %s27
      %s30 = sphi 0, %s29
      %s44 = sphi 0, %s30
      %s50 = sphi 0, %s52
      %s53 = sphi 0, %s50
      %s54 = sphi 0, %s53
      %s70 = sphi 0, %s54
      %s74 = sphi 0, %s74
      %s76 = sphi 0, %s74
      %s77 = sphi 0, %s76
      %s91 = sphi 0, %s77
      %s95 = sphi 0, %s95
      %s97 = sphi 0, %s95
      %s98 = sphi 0, %s97
      %s112 = sphi 0, %s98
      %s116 = sphi 0, %s116
      %s118 = sphi 0, %s116
      %s119 = sphi 0, %s118
      %s133 = sphi 0, %s119
      %s137 = sphi 0, %s137
      %s139 = sphi 0, %s137
      %s140 = sphi 0, %s139
      %s154 = sphi 0, %s140
      %s160 = sphi 0, %s162
      %s163 = sphi 0, %s160
      %s164 = sphi 0, %s163
      %s180 = sphi 0, %s164
    $region4: #{tpu_custom_call.1} parent=1 // loop_header_branch
      %22 = sbr.rel (%p20) target = $region8
    $region5: #{tpu_custom_call.1} parent=1 // loop_body
      %s24 = ssub.s32 %s19, 1
      %s25 = ssub.s32 %s19, 2
      %s26 = sadd.s32 %s19, 1
      %s28 = sadd.s32 %s27, 1
      %p31 = scmp.eq.s32.totalorder %s19, 1
      %p32 = scmp.ne.s32.totalorder %s27, %s29
      %p33 = scmp.eq.s32.totalorder %s19, 0
      %p34 = por %p32, %p33
      %p35 = scmp.ne.s32.totalorder %s27, %s29
      %p36 = scmp.eq.s32.totalorder %s24, 1
      %p37 = por %p35, %p36
      %p38 = scmp.ne.s32.totalorder %s29, %s30
      %p39 = scmp.eq.s32.totalorder %s24, 0
      %p40 = por %p38, %p39
      %p41 = scmp.ne.s32.totalorder %s29, %s30
      %p42 = scmp.eq.s32.totalorder %s25, 1
      %p43 = por %p41, %p42
      %p45 = scmp.ne.s32.totalorder %s30, %s44
      %p46 = scmp.eq.s32.totalorder %s25, 0
      %p47 = por %p45, %p46
      %s48 = ssub.s32 %s19, %s26
      %p49 = scmp.eq.s32.totalorder %s48, 0
      %s51 = sadd.s32 %s50, 1
      %s52 = scalar_select %p49, %s50, %s51
      %p55 = pneg %p49
      %p56 = scmp.eq.s32.totalorder %s19, 1
      %p57 = por %p55, %p56
      %p58 = scmp.ne.s32.totalorder %s50, %s53
      %p59 = scmp.eq.s32.totalorder %s19, 0
      %p60 = por %p58, %p59
      %p61 = scmp.ne.s32.totalorder %s50, %s53
      %p62 = scmp.eq.s32.totalorder %s24, 1
      %p63 = por %p61, %p62
      %p64 = scmp.ne.s32.totalorder %s53, %s54
      %p65 = scmp.eq.s32.totalorder %s24, 0
      %p66 = por %p64, %p65
      %p67 = scmp.ne.s32.totalorder %s53, %s54
      %p68 = scmp.eq.s32.totalorder %s25, 1
      %p69 = por %p67, %p68
      %p71 = scmp.ne.s32.totalorder %s54, %s70
      %p72 = scmp.eq.s32.totalorder %s25, 0
      %p73 = por %p71, %p72
      %s75 = sadd.s32 %s74, 1
      %p78 = scmp.eq.s32.totalorder %s19, 1
      %p79 = scmp.ne.s32.totalorder %s74, %s76
      %p80 = scmp.eq.s32.totalorder %s19, 0
      %p81 = por %p79, %p80
      %p82 = scmp.ne.s32.totalorder %s74, %s76
      %p83 = scmp.eq.s32.totalorder %s24, 1
      %p84 = por %p82, %p83
      %p85 = scmp.ne.s32.totalorder %s76, %s77
      %p86 = scmp.eq.s32.totalorder %s24, 0
      %p87 = por %p85, %p86
      %p88 = scmp.ne.s32.totalorder %s76, %s77
      %p89 = scmp.eq.s32.totalorder %s25, 1
      %p90 = por %p88, %p89
      %p92 = scmp.ne.s32.totalorder %s77, %s91
      %p93 = scmp.eq.s32.totalorder %s25, 0
      %p94 = por %p92, %p93
      %s96 = sadd.s32 %s95, 1
      %p99 = scmp.eq.s32.totalorder %s19, 1
      %p100 = scmp.ne.s32.totalorder %s95, %s97
      %p101 = scmp.eq.s32.totalorder %s19, 0
      %p102 = por %p100, %p101
      %p103 = scmp.ne.s32.totalorder %s95, %s97
      %p104 = scmp.eq.s32.totalorder %s24, 1
      %p105 = por %p103, %p104
      %p106 = scmp.ne.s32.totalorder %s97, %s98
      %p107 = scmp.eq.s32.totalorder %s24, 0
      %p108 = por %p106, %p107
      %p109 = scmp.ne.s32.totalorder %s97, %s98
      %p110 = scmp.eq.s32.totalorder %s25, 1
      %p111 = por %p109, %p110
      %p113 = scmp.ne.s32.totalorder %s98, %s112
      %p114 = scmp.eq.s32.totalorder %s25, 0
      %p115 = por %p113, %p114
      %s117 = sadd.s32 %s116, 1
      %p120 = scmp.eq.s32.totalorder %s19, 1
      %p121 = scmp.ne.s32.totalorder %s116, %s118
      %p122 = scmp.eq.s32.totalorder %s19, 0
      %p123 = por %p121, %p122
      %p124 = scmp.ne.s32.totalorder %s116, %s118
      %p125 = scmp.eq.s32.totalorder %s24, 1
      %p126 = por %p124, %p125
      %p127 = scmp.ne.s32.totalorder %s118, %s119
      %p128 = scmp.eq.s32.totalorder %s24, 0
      %p129 = por %p127, %p128
      %p130 = scmp.ne.s32.totalorder %s118, %s119
      %p131 = scmp.eq.s32.totalorder %s25, 1
      %p132 = por %p130, %p131
      %p134 = scmp.ne.s32.totalorder %s119, %s133
      %p135 = scmp.eq.s32.totalorder %s25, 0
      %p136 = por %p134, %p135
      %s138 = sadd.s32 %s137, 1
      %p141 = scmp.eq.s32.totalorder %s19, 1
      %p142 = scmp.ne.s32.totalorder %s137, %s139
      %p143 = scmp.eq.s32.totalorder %s19, 0
      %p144 = por %p142, %p143
      %p145 = scmp.ne.s32.totalorder %s137, %s139
      %p146 = scmp.eq.s32.totalorder %s24, 1
      %p147 = por %p145, %p146
      %p148 = scmp.ne.s32.totalorder %s139, %s140
      %p149 = scmp.eq.s32.totalorder %s24, 0
      %p150 = por %p148, %p149
      %p151 = scmp.ne.s32.totalorder %s139, %s140
      %p152 = scmp.eq.s32.totalorder %s25, 1
      %p153 = por %p151, %p152
      %p155 = scmp.ne.s32.totalorder %s140, %s154
      %p156 = scmp.eq.s32.totalorder %s25, 0
      %p157 = por %p155, %p156
      %s158 = ssub.s32 %s19, %s26
      %p159 = scmp.eq.s32.totalorder %s158, 0
      %s161 = sadd.s32 %s160, 1
      %s162 = scalar_select %p159, %s160, %s161
      %p165 = pneg %p159
      %p166 = scmp.eq.s32.totalorder %s19, 1
      %p167 = por %p165, %p166
      %p168 = scmp.ne.s32.totalorder %s160, %s163
      %p169 = scmp.eq.s32.totalorder %s19, 0
      %p170 = por %p168, %p169
      %p171 = scmp.ne.s32.totalorder %s160, %s163
      %p172 = scmp.eq.s32.totalorder %s24, 1
      %p173 = por %p171, %p172
      %p174 = scmp.ne.s32.totalorder %s163, %s164
      %p175 = scmp.eq.s32.totalorder %s24, 0
      %p176 = por %p174, %p175
      %p177 = scmp.ne.s32.totalorder %s163, %s164
      %p178 = scmp.eq.s32.totalorder %s25, 1
      %p179 = por %p177, %p178
      %p181 = scmp.ne.s32.totalorder %s164, %s180
      %p182 = scmp.eq.s32.totalorder %s25, 0
      %p183 = por %p181, %p182
      %p184 = scmp.le.s32.totalorder 1, %s19
      %p185 = scmp.lt.s32.totalorder %s19, 3
      %p186 = pnand %p184, %p185
      %p187 = pneg %p186
      // Predicated region
      $region9: #{tpu_custom_call.1} parent=5 // pred_check
        _
      $region10: #{tpu_custom_call.1} parent=5 // pred_check_branch
        %189 = sbr.rel (%p186) target = $region12
      $region11: #{tpu_custom_call.1} parent=5 // pred_region
        %s190 = ssub.s32 %s19, 1
        // Predicated region
        $region13: #{tpu_custom_call.1} parent=11 // pred_check
          %p191 = pneg %p40
        $region14: #{tpu_custom_call.1} parent=11 // pred_check_branch
          %193 = sbr.rel (%p191) target = $region16
        $region15: #{tpu_custom_call.1} parent=11 // pred_region
          _
        $region16: #{tpu_custom_call.1} parent=11 // pred_fallthru
          _
        // Predicated region
        $region17: #{tpu_custom_call.1} parent=11 // pred_check
          %p194 = pneg %p87
        $region18: #{tpu_custom_call.1} parent=11 // pred_check_branch
          %196 = sbr.rel (%p194) target = $region20
        $region19: #{tpu_custom_call.1} parent=11 // pred_region
          _
        $region20: #{tpu_custom_call.1} parent=11 // pred_fallthru
          _
        // Predicated region
        $region21: #{tpu_custom_call.1} parent=11 // pred_check
          %p197 = pneg %p108
        $region22: #{tpu_custom_call.1} parent=11 // pred_check_branch
          %199 = sbr.rel (%p197) target = $region24
        $region23: #{tpu_custom_call.1} parent=11 // pred_region
          _
        $region24: #{tpu_custom_call.1} parent=11 // pred_fallthru
          _
        // Predicated region
        $region25: #{tpu_custom_call.1} parent=11 // pred_check
          %p200 = pneg %p129
        $region26: #{tpu_custom_call.1} parent=11 // pred_check_branch
          %202 = sbr.rel (%p200) target = $region28
        $region27: #{tpu_custom_call.1} parent=11 // pred_region
          %s204 = ssub.s32 512, 512
          %205 = vsyncadd [#allocation6], %s204
          %s206 = sshll.u32 [#allocation5], 4
          %s207 = int_to_ptr.vmem [resolvable:$true] %s206
          %212 = dma.hbm_to_vmem [thread:$0]  %s4, 512, %s207, [#allocation6], 256, 256, 16
        $region28: #{tpu_custom_call.1} parent=11 // pred_fallthru
          _
        // Predicated region
        $region29: #{tpu_custom_call.1} parent=11 // pred_check
          %p213 = pneg %p150
        $region30: #{tpu_custom_call.1} parent=11 // pred_check_branch
          %215 = sbr.rel (%p213) target = $region32
        $region31: #{tpu_custom_call.1} parent=11 // pred_region
          _
        $region32: #{tpu_custom_call.1} parent=11 // pred_fallthru
          _
      $region12: #{tpu_custom_call.1} parent=5 // pred_fallthru
        _
      %p216 = scmp.lt.s32.totalorder %s19, 2
      // Predicated region
      $region33: #{tpu_custom_call.1} parent=5 // pred_check
        %p217 = pneg %p216
      $region34: #{tpu_custom_call.1} parent=5 // pred_check_branch
        %219 = sbr.rel (%p217) target = $region36
      $region35: #{tpu_custom_call.1} parent=5 // pred_region
        // Predicated region
        $region37: #{tpu_custom_call.1} parent=35 // pred_check
          %p220 = pneg %p60
        $region38: #{tpu_custom_call.1} parent=35 // pred_check_branch
          %222 = sbr.rel (%p220) target = $region40
        $region39: #{tpu_custom_call.1} parent=35 // pred_region
          %s223 = sand.u32 %s50, 1
          %s224 = scalar_lea.sflag [#allocation3], %s223
          %s225 = sand.u32 %s50, 1
          %s226 = smul.addr %s225, 32
          %s227 = scalar_lea.vmem [#allocation2], %s226
          %s229 = ssub.s32 512, 512
          %230 = vsyncadd %s224, %s229
          %s231 = smul.addr %s19, 4
          %s232 = smul.addr %s231, 128
          %s233 = scalar_lea.hbm %s1, %s232
          %s234 = sshll.u32 %s227, 4
          %s235 = int_to_ptr.vmem [resolvable:$true] %s234
          %240 = dma.hbm_to_vmem [thread:$0]  %s233, 512, %s235, %s224, 256, 256, 16
        $region40: #{tpu_custom_call.1} parent=35 // pred_fallthru
          _
      $region36: #{tpu_custom_call.1} parent=5 // pred_fallthru
        _
      %p241 = scmp.le.s32.totalorder 1, %s19
      %p242 = scmp.lt.s32.totalorder %s19, 3
      %p243 = pnand %p241, %p242
      %p244 = pneg %p243
      // Predicated region
      $region41: #{tpu_custom_call.1} parent=5 // pred_check
        _
      $region42: #{tpu_custom_call.1} parent=5 // pred_check_branch
        %246 = sbr.rel (%p243) target = $region44
      $region43: #{tpu_custom_call.1} parent=5 // pred_region
        %s247 = ssub.s32 %s19, 1
        %s248 = sand.u32 %s53, 1
        %s249 = scalar_lea.sflag [#allocation3], %s248
        %s250 = sand.u32 %s53, 1
        %s251 = smul.addr %s250, 32
        %s252 = scalar_lea.vmem [#allocation2], %s251
        // Predicated region
        $region45: #{tpu_custom_call.1} parent=43 // pred_check
          %p253 = pneg %p66
        $region46: #{tpu_custom_call.1} parent=43 // pred_check_branch
          %255 = sbr.rel (%p253) target = $region48
        $region47: #{tpu_custom_call.1} parent=43 // pred_region
          %256 = dma.done %s249, 512
        $region48: #{tpu_custom_call.1} parent=43 // pred_fallthru
          _
        // Predicated region
        $region49: #{tpu_custom_call.1} parent=43 // pred_check
          %p257 = pneg %p129
        $region50: #{tpu_custom_call.1} parent=43 // pred_check_branch
          %259 = sbr.rel (%p257) target = $region52
        $region51: #{tpu_custom_call.1} parent=43 // pred_region
          %260 = dma.done [#allocation6], 512
        $region52: #{tpu_custom_call.1} parent=43 // pred_fallthru
          _
        %p261 = pneg %p40
        %p262 = pneg %p37
        %s263 = sand.u32 %s53, 1
        %s264 = scalar_lea.sflag [#allocation3], %s263
        %s265 = sand.u32 %s53, 1
        %s266 = smul.addr %s265, 32
        %s267 = scalar_lea.vmem [#allocation2], %s266
        %p268 = pneg %p66
        %p269 = pneg %p63
        %p270 = pneg %p87
        %p271 = pneg %p84
        %p272 = pneg %p108
        %p273 = pneg %p105
        %p274 = pneg %p129
        %p275 = pneg %p126
        %p276 = pneg %p150
        %p277 = pneg %p147
        %p278 = pneg %p176
        %p279 = pneg %p173
        %s280 = sand.u32 %s163, 1
        %s281 = scalar_lea.sflag [#allocation4], %s280
        %s282 = sand.u32 %s163, 1
        %s283 = smul.addr %s282, 32
        %s284 = scalar_lea.vmem [#allocation7], %s283
        %v285 = vld [vmem:[%s252] sm:$0xff]
        %v286 = vld [vmem:[%s252 + $0x8] sm:$0xff]
        %v287 = vld [vmem:[%s252 + $0x10] sm:$0xff]
        %v288 = vld [vmem:[%s252 + $0x18] sm:$0xff]
        %v289 = vld [vmem:[%s0] ss:$2 sm:$0x3]
        %v290 = vlaneseq
        %v291 = vshrl.u32 %v290, 7
        %v292 = vsub.s32 0, %v291
        %v293 = vrot.slane %v289, %v292
        %v294 = vlaneseq
        %v295 = vshrl.u32 %v294, 7
        %v296 = vsub.s32 1, %v295
        %v297 = vrot.slane %v289, %v296
        %s298 = scalar_lea.vmem %s0, 1
        %v299 = vld [vmem:[%s298] ss:$2 sm:$0x3]
        %v300 = vlaneseq
        %v301 = vshrl.u32 %v300, 7
        %v302 = vsub.s32 0, %v301
        %v303 = vrot.slane %v299, %v302
        %v304 = vlaneseq
        %v305 = vshrl.u32 %v304, 7
        %v306 = vsub.s32 1, %v305
        %v307 = vrot.slane %v299, %v306
        %v308 = vadd.s32 %v293, 4294967295
        %v309 = vadd.s32 %v297, 4294967295
        %vm310 = vcmp.ge.s32.totalorder %v308, 0
        %vm311 = vcmp.ge.s32.totalorder %v309, 0
        %vm312 = vcmp.le.s32.totalorder %v308, 15
        %vm313 = vcmp.le.s32.totalorder %v309, 15
        %vm314 = vmand %vm310, %vm312
        %vm315 = vmand %vm311, %vm313
        %v316 = vadd.s32 %v293, 1
        %v317 = vadd.s32 %v297, 1
        %vm318 = vcmp.ge.s32.totalorder %v316, 0
        %vm319 = vcmp.ge.s32.totalorder %v317, 0
        %vm320 = vcmp.le.s32.totalorder %v316, 15
        %vm321 = vcmp.le.s32.totalorder %v317, 15
        %vm322 = vmand %vm318, %vm320
        %vm323 = vmand %vm319, %vm321
        %v324 = vadd.s32 %v303, 4294967295
        %v325 = vadd.s32 %v307, 4294967295
        %vm326 = vcmp.ge.s32.totalorder %v324, 0
        %vm327 = vcmp.ge.s32.totalorder %v325, 0
        %vm328 = vcmp.le.s32.totalorder %v324, 15
        %vm329 = vcmp.le.s32.totalorder %v325, 15
        %vm330 = vmand %vm326, %vm328
        %vm331 = vmand %vm327, %vm329
        %v332 = vadd.s32 %v303, 1
        %v333 = vadd.s32 %v307, 1
        %vm334 = vcmp.ge.s32.totalorder %v332, 0
        %vm335 = vcmp.ge.s32.totalorder %v333, 0
        %vm336 = vcmp.le.s32.totalorder %v332, 15
        %vm337 = vcmp.le.s32.totalorder %v333, 15
        %vm338 = vmand %vm334, %vm336
        %vm339 = vmand %vm335, %vm337
        %345 = vrot.lane.b32.xlu0 0.0, 17
        %v346 = vpop.permute.xlu0 %345
        %347 = vrot.lane.b32.xlu0 %v285, 17
        %v348 = vpop.permute.xlu0 %347
        %349 = vrot.lane.b32.xlu0 %v286, 17
        %v350 = vpop.permute.xlu0 %349
        %351 = vrot.lane.b32.xlu0 %v287, 17
        %v352 = vpop.permute.xlu0 %351
        %353 = vrot.lane.b32.xlu0 %v288, 17
        %v354 = vpop.permute.xlu0 %353
        %vm355 = vcmask 138240
        %v356 = vsel %vm355, %v346, %v348
        %v357 = vsel %vm355, %v348, %v350
        %v358 = vsel %vm355, %v346, %v352
        %v359 = vsel %vm355, %v352, %v354
        %364 = vrot.lane.b32.xlu0 0.0, 15
        %v365 = vpop.permute.xlu0 %364
        %366 = vrot.lane.b32.xlu0 %v285, 15
        %v367 = vpop.permute.xlu0 %366
        %368 = vrot.lane.b32.xlu0 %v286, 15
        %v369 = vpop.permute.xlu0 %368
        %370 = vrot.lane.b32.xlu0 %v287, 15
        %v371 = vpop.permute.xlu0 %370
        %372 = vrot.lane.b32.xlu0 %v288, 15
        %v373 = vpop.permute.xlu0 %372
        %vm374 = vcmask 121856
        %v375 = vsel %vm374, %v365, %v367
        %v376 = vsel %vm374, %v367, %v369
        %v377 = vsel %vm374, %v365, %v371
        %v378 = vsel %vm374, %v371, %v373
        %v383 = vsel %vm330, %v356, %v375
        %v384 = vsel %vm331, %v357, %v376
        %v385 = vsel %vm330, %v358, %v377
        %v386 = vsel %vm331, %v359, %v378
        %387 = vrot.lane.b32.xlu0 %v285, 113
        %v388 = vpop.permute.xlu0 %387
        %389 = vrot.lane.b32.xlu0 %v286, 113
        %v390 = vpop.permute.xlu0 %389
        %391 = vrot.lane.b32.xlu0 0.0, 113
        %v392 = vpop.permute.xlu0 %391
        %393 = vrot.lane.b32.xlu0 %v287, 113
        %v394 = vpop.permute.xlu0 %393
        %395 = vrot.lane.b32.xlu0 %v288, 113
        %v396 = vpop.permute.xlu0 %395
        %vm397 = vcmask 924672
        %v398 = vsel %vm397, %v388, %v390
        %v399 = vsel %vm397, %v390, %v392
        %v400 = vsel %vm397, %v394, %v396
        %v401 = vsel %vm397, %v396, %v392
        %406 = vrot.lane.b32.xlu0 %v285, 111
        %v407 = vpop.permute.xlu0 %406
        %408 = vrot.lane.b32.xlu0 %v286, 111
        %v409 = vpop.permute.xlu0 %408
        %410 = vrot.lane.b32.xlu0 0.0, 111
        %v411 = vpop.permute.xlu0 %410
        %412 = vrot.lane.b32.xlu0 %v287, 111
        %v413 = vpop.permute.xlu0 %412
        %414 = vrot.lane.b32.xlu0 %v288, 111
        %v415 = vpop.permute.xlu0 %414
        %vm416 = vcmask 908288
        %v417 = vsel %vm416, %v407, %v409
        %v418 = vsel %vm416, %v409, %v411
        %v419 = vsel %vm416, %v413, %v415
        %v420 = vsel %vm416, %v415, %v411
        %v425 = vsel %vm330, %v398, %v417
        %v426 = vsel %vm331, %v399, %v418
        %v427 = vsel %vm330, %v400, %v419
        %v428 = vsel %vm331, %v401, %v420
        %v429 = vsel %vm314, %v383, %v425
        %v430 = vsel %vm315, %v384, %v426
        %v431 = vsel %vm314, %v385, %v427
        %v432 = vsel %vm315, %v386, %v428
        %433 = vrot.lane.b32.xlu0 0.0, 16
        %v434 = vpop.permute.xlu0 %433
        %435 = vrot.lane.b32.xlu0 %v285, 16
        %v436 = vpop.permute.xlu0 %435
        %437 = vrot.lane.b32.xlu0 %v286, 16
        %v438 = vpop.permute.xlu0 %437
        %439 = vrot.lane.b32.xlu0 %v287, 16
        %v440 = vpop.permute.xlu0 %439
        %441 = vrot.lane.b32.xlu0 %v288, 16
        %v442 = vpop.permute.xlu0 %441
        %vm443 = vcmask 130048
        %v444 = vsel %vm443, %v434, %v436
        %v445 = vsel %vm443, %v436, %v438
        %v446 = vsel %vm443, %v434, %v440
        %v447 = vsel %vm443, %v440, %v442
        %452 = vrot.lane.b32.xlu0 %v285, 112
        %v453 = vpop.permute.xlu0 %452
        %454 = vrot.lane.b32.xlu0 %v286, 112
        %v455 = vpop.permute.xlu0 %454
        %456 = vrot.lane.b32.xlu0 0.0, 112
        %v457 = vpop.permute.xlu0 %456
        %458 = vrot.lane.b32.xlu0 %v287, 112
        %v459 = vpop.permute.xlu0 %458
        %460 = vrot.lane.b32.xlu0 %v288, 112
        %v461 = vpop.permute.xlu0 %460
        %vm462 = vcmask 916480
        %v463 = vsel %vm462, %v453, %v455
        %v464 = vsel %vm462, %v455, %v457
        %v465 = vsel %vm462, %v459, %v461
        %v466 = vsel %vm462, %v461, %v457
        %v471 = vsel %vm314, %v444, %v463
        %v472 = vsel %vm315, %v445, %v464
        %v473 = vsel %vm314, %v446, %v465
        %v474 = vsel %vm315, %v447, %v466
        %v475 = vsel %vm338, %v375, %v356
        %v476 = vsel %vm339, %v376, %v357
        %v477 = vsel %vm338, %v377, %v358
        %v478 = vsel %vm339, %v378, %v359
        %v479 = vsel %vm338, %v417, %v398
        %v480 = vsel %vm339, %v418, %v399
        %v481 = vsel %vm338, %v419, %v400
        %v482 = vsel %vm339, %v420, %v401
        %v483 = vsel %vm314, %v475, %v479
        %v484 = vsel %vm315, %v476, %v480
        %v485 = vsel %vm314, %v477, %v481
        %v486 = vsel %vm315, %v478, %v482
        %487 = vrot.lane.b32.xlu0 0.0, 1
        %v488 = vpop.permute.xlu0 %487
        %489 = vrot.lane.b32.xlu0 %v285, 1
        %v490 = vpop.permute.xlu0 %489
        %491 = vrot.lane.b32.xlu0 %v286, 1
        %v492 = vpop.permute.xlu0 %491
        %493 = vrot.lane.b32.xlu0 %v287, 1
        %v494 = vpop.permute.xlu0 %493
        %495 = vrot.lane.b32.xlu0 %v288, 1
        %v496 = vpop.permute.xlu0 %495
        %vm497 = vcmask 7168
        %v498 = vsel %vm497, %v488, %v490
        %v499 = vsel %vm497, %v490, %v492
        %v500 = vsel %vm497, %v488, %v494
        %v501 = vsel %vm497, %v494, %v496
        %506 = vrot.lane.b32.xlu0 %v285, 127
        %v507 = vpop.permute.xlu0 %506
        %508 = vrot.lane.b32.xlu0 %v286, 127
        %v509 = vpop.permute.xlu0 %508
        %510 = vrot.lane.b32.xlu0 0.0, 127
        %v511 = vpop.permute.xlu0 %510
        %512 = vrot.lane.b32.xlu0 %v287, 127
        %v513 = vpop.permute.xlu0 %512
        %514 = vrot.lane.b32.xlu0 %v288, 127
        %v515 = vpop.permute.xlu0 %514
        %vm516 = vcmask 1039360
        %v517 = vsel %vm516, %v507, %v509
        %v518 = vsel %vm516, %v509, %v511
        %v519 = vsel %vm516, %v513, %v515
        %v520 = vsel %vm516, %v515, %v511
        %v525 = vsel %vm330, %v498, %v517
        %v526 = vsel %vm331, %v499, %v518
        %v527 = vsel %vm330, %v500, %v519
        %v528 = vsel %vm331, %v501, %v520
        %v529 = vsel %vm338, %v517, %v498
        %v530 = vsel %vm339, %v518, %v499
        %v531 = vsel %vm338, %v519, %v500
        %v532 = vsel %vm339, %v520, %v501
        %v533 = vsel %vm322, %v425, %v383
        %v534 = vsel %vm323, %v426, %v384
        %v535 = vsel %vm322, %v427, %v385
        %v536 = vsel %vm323, %v428, %v386
        %v537 = vsel %vm322, %v463, %v444
        %v538 = vsel %vm323, %v464, %v445
        %v539 = vsel %vm322, %v465, %v446
        %v540 = vsel %vm323, %v466, %v447
        %v541 = vsel %vm322, %v479, %v475
        %v542 = vsel %vm323, %v480, %v476
        %v543 = vsel %vm322, %v481, %v477
        %v544 = vsel %vm323, %v482, %v478
        %v545 = vld [vmem:[%s2] sm:$0xff]
        %v546 = vld [vmem:[%s2 + $0x8] sm:$0xff]
        %v547 = vld [vmem:[%s2 + $0x10] sm:$0xff]
        %v548 = vld [vmem:[%s2 + $0x18] sm:$0xff]
        %v549 = vld [vmem:[%s3] sm:$0xff]
        %v550 = vld [vmem:[%s3 + $0x8] sm:$0xff]
        %552 = vset.pattern.permute.xlu0 0
        %553 = vperm.xlu0 %552, %v549
        %v554 = vpop.permute.xlu0 %553
        %557 = vset.pattern.permute.xlu0 0
        %558 = vperm.xlu0 %557, %v550
        %v559 = vpop.permute.xlu0 %558
        %v562 = vsel %vm443, %v546, 0
        %v565 = vsel %vm443, %v548, 0
        %567 = vmatprep.subr.mxu0 %v430
        %568 = vmatpush1.msra.mxu0 %v429
        %569 = vmatprep.subr.mxu0 %v432
        %570 = vmatpush1.msra.mxu0 %v431
        %571 = vmatprep.subr.mxu0 %v472
        %572 = vmatpush1.msra.mxu0 %v471
        %573 = vmatprep.subr.mxu0 %v474
        %574 = vmatpush1.msra.mxu0 %v473
        %575 = vmatprep.subr.mxu0 %v484
        %576 = vmatpush1.msra.mxu0 %v483
        %577 = vmatprep.subr.mxu0 %v486
        %578 = vmatpush1.msra.mxu0 %v485
        %579 = vmatprep.subr.mxu0 %v526
        %580 = vmatpush1.msra.mxu0 %v525
        %581 = vmatprep.subr.mxu0 %v528
        %582 = vmatpush1.msra.mxu0 %v527
        %583 = vmatprep.subr.mxu0 %v286
        %584 = vmatpush1.msra.mxu0 %v285
        %585 = vmatprep.subr.mxu0 %v288
        %586 = vmatpush1.msra.mxu0 %v287
        %587 = vmatprep.subr.mxu0 %v530
        %588 = vmatpush1.msra.mxu0 %v529
        %589 = vmatprep.subr.mxu0 %v532
        %590 = vmatpush1.msra.mxu0 %v531
        %591 = vmatprep.subr.mxu0 %v534
        %592 = vmatpush1.msra.mxu0 %v533
        %593 = vmatprep.subr.mxu0 %v536
        %594 = vmatpush1.msra.mxu0 %v535
        %595 = vmatprep.subr.mxu0 %v538
        %596 = vmatpush1.msra.mxu0 %v537
        %597 = vmatprep.subr.mxu0 %v540
        %598 = vmatpush1.msra.mxu0 %v539
        %599 = vmatprep.subr.mxu0 %v542
        %600 = vmatpush1.msra.mxu0 %v541
        %601 = vmatprep.subr.mxu0 %v544
        %602 = vmatpush1.msra.mxu0 %v543
        %603 = vmatprep.subr.mxu0 0.0
        %604 = vmatpush1.msra.mxu0 0.0
        %605 = vmatprep.subr.mxu0 0.0
        %606 = vmatpush1.msra.mxu0 0.0
        %607 = vmatprep.subr.mxu0 0.0
        %608 = vmatpush1.msra.mxu0 0.0
        %609 = vmatprep.subr.mxu0 0.0
        %610 = vmatpush1.msra.mxu0 0.0
        %611 = vmatprep.subr.mxu0 0.0
        %612 = vmatpush1.msra.mxu0 0.0
        %613 = vmatprep.subr.mxu0 0.0
        %614 = vmatpush1.msra.mxu0 0.0
        %615 = vmatprep.subr.mxu0 0.0
        %616 = vmatpush1.msra.mxu0 0.0
        %617 = vmatprep.subr.mxu0 0.0
        %618 = vmatpush1.msra.mxu0 0.0
        %619 = vmatprep.subr.mxu0 0.0
        %620 = vmatpush1.msra.mxu0 0.0
        %621 = vmatprep.subr.mxu0 0.0
        %622 = vmatpush1.msra.mxu0 0.0
        %623 = vmatprep.subr.mxu0 0.0
        %624 = vmatpush1.msra.mxu0 0.0
        %625 = vmatprep.subr.mxu0 0.0
        %626 = vmatpush1.msra.mxu0 0.0
        %627 = vmatprep.subr.mxu0 0.0
        %628 = vmatpush1.msra.mxu0 0.0
        %629 = vmatprep.subr.mxu0 0.0
        %630 = vmatpush1.msra.mxu0 0.0
        %631 = vmatprep.mubr.f32.mxu0 %v562
        %632 = vmatmul.mubr.f32.gmra.mrb[0].mxu0 %v545
        %v633 = vpop.f32.mrb[0].mxu0
        %v634 = vadd.f32 %v554, %v633
        %v635 = vpop.f32.mrb[0].mxu0
        %v636 = vadd.f32 %v554, %v635
        %637 = vmatprep.mubr.f32.mxu0 %v565
        %638 = vmatmul.mubr.f32.gmra.mrb[0].mxu0 %v547
        %v639 = vpop.f32.mrb[0].mxu0
        %v640 = vadd.f32 %v559, %v639
        %v641 = vpop.f32.mrb[0].mxu0
        %v642 = vadd.f32 %v559, %v641
        %643 = vdwg.mxu0
        %v644 = vadd.f32 %v634, %v636
        %645 = vadd.xlane.f32.xlu0 %v644
        %v646 = vpop.xlane.xlu0 %645
        %v647 = vadd.f32 %v640, %v642
        %648 = vadd.xlane.f32.xlu0 %v647
        %v649 = vpop.xlane.xlu0 %648
        %v650 = vmul.f32 %v634, %v634
        %v651 = vmul.f32 %v636, %v636
        %v652 = vmul.f32 %v640, %v640
        %v653 = vmul.f32 %v642, %v642
        %v654 = vadd.f32 %v650, %v651
        %655 = vadd.xlane.f32.xlu0 %v654
        %v656 = vpop.xlane.xlu0 %655
        %v657 = vadd.f32 %v652, %v653
        %658 = vadd.xlane.f32.xlu0 %v657
        %v659 = vpop.xlane.xlu0 %658
        %v660 = vmul.f32 %v646, 0.00390625
        %v661 = vmul.f32 %v649, 0.00390625
        %v662 = vmul.f32 %v656, 0.00390625
        %v663 = vmul.f32 %v659, 0.00390625
        %v664 = vmul.f32 %v660, %v660
        %v665 = vmul.f32 %v661, %v661
        %v666 = vsub.f32 %v662, %v664
        %v667 = vsub.f32 %v663, %v665
        %v668 = vsub.f32 %v634, %v660
        %v669 = vsub.f32 %v636, %v660
        %v670 = vsub.f32 %v640, %v661
        %v671 = vsub.f32 %v642, %v661
        %v672 = vadd.f32 %v666, 1e-05
        %v673 = vadd.f32 %v667, 1e-05
        %v674 = vrsqrt.pop %v672
        %v675 = vrsqrt.pop %v673
        %v676 = vmul.f32 %v668, %v674
        %v677 = vmul.f32 %v669, %v674
        %v678 = vmul.f32 %v670, %v675
        %v679 = vmul.f32 %v671, %v675
        %v680 = vmax.f32 %v676, 0.0
        %v681 = vmax.f32 %v677, 0.0
        %v682 = vmax.f32 %v678, 0.0
        %v683 = vmax.f32 %v679, 0.0
        %688 = vrot.lane.b32.xlu0 %v680, 17
        %v689 = vpop.permute.xlu0 %688
        %690 = vrot.lane.b32.xlu0 %v681, 17
        %v691 = vpop.permute.xlu0 %690
        %692 = vrot.lane.b32.xlu0 %v682, 17
        %v693 = vpop.permute.xlu0 %692
        %694 = vrot.lane.b32.xlu0 %v683, 17
        %v695 = vpop.permute.xlu0 %694
        %v696 = vsel %vm355, %v346, %v689
        %v697 = vsel %vm355, %v689, %v691
        %v698 = vsel %vm355, %v346, %v693
        %v699 = vsel %vm355, %v693, %v695
        %704 = vrot.lane.b32.xlu0 %v680, 15
        %v705 = vpop.permute.xlu0 %704
        %706 = vrot.lane.b32.xlu0 %v681, 15
        %v707 = vpop.permute.xlu0 %706
        %708 = vrot.lane.b32.xlu0 %v682, 15
        %v709 = vpop.permute.xlu0 %708
        %710 = vrot.lane.b32.xlu0 %v683, 15
        %v711 = vpop.permute.xlu0 %710
        %v712 = vsel %vm374, %v365, %v705
        %v713 = vsel %vm374, %v705, %v707
        %v714 = vsel %vm374, %v365, %v709
        %v715 = vsel %vm374, %v709, %v711
        %v720 = vsel %vm330, %v696, %v712
        %v721 = vsel %vm331, %v697, %v713
        %v722 = vsel %vm330, %v698, %v714
        %v723 = vsel %vm331, %v699, %v715
        %724 = vrot.lane.b32.xlu0 %v680, 113
        %v725 = vpop.permute.xlu0 %724
        %726 = vrot.lane.b32.xlu0 %v681, 113
        %v727 = vpop.permute.xlu0 %726
        %728 = vrot.lane.b32.xlu0 %v682, 113
        %v729 = vpop.permute.xlu0 %728
        %730 = vrot.lane.b32.xlu0 %v683, 113
        %v731 = vpop.permute.xlu0 %730
        %v732 = vsel %vm397, %v725, %v727
        %v733 = vsel %vm397, %v727, %v392
        %v734 = vsel %vm397, %v729, %v731
        %v735 = vsel %vm397, %v731, %v392
        %740 = vrot.lane.b32.xlu0 %v680, 111
        %v741 = vpop.permute.xlu0 %740
        %742 = vrot.lane.b32.xlu0 %v681, 111
        %v743 = vpop.permute.xlu0 %742
        %744 = vrot.lane.b32.xlu0 %v682, 111
        %v745 = vpop.permute.xlu0 %744
        %746 = vrot.lane.b32.xlu0 %v683, 111
        %v747 = vpop.permute.xlu0 %746
        %v748 = vsel %vm416, %v741, %v743
        %v749 = vsel %vm416, %v743, %v411
        %v750 = vsel %vm416, %v745, %v747
        %v751 = vsel %vm416, %v747, %v411
        %v756 = vsel %vm330, %v732, %v748
        %v757 = vsel %vm331, %v733, %v749
        %v758 = vsel %vm330, %v734, %v750
        %v759 = vsel %vm331, %v735, %v751
        %v760 = vsel %vm314, %v720, %v756
        %v761 = vsel %vm315, %v721, %v757
        %v762 = vsel %vm314, %v722, %v758
        %v763 = vsel %vm315, %v723, %v759
        %764 = vrot.lane.b32.xlu0 %v680, 16
        %v765 = vpop.permute.xlu0 %764
        %766 = vrot.lane.b32.xlu0 %v681, 16
        %v767 = vpop.permute.xlu0 %766
        %768 = vrot.lane.b32.xlu0 %v682, 16
        %v769 = vpop.permute.xlu0 %768
        %770 = vrot.lane.b32.xlu0 %v683, 16
        %v771 = vpop.permute.xlu0 %770
        %v772 = vsel %vm443, %v434, %v765
        %v773 = vsel %vm443, %v765, %v767
        %v774 = vsel %vm443, %v434, %v769
        %v775 = vsel %vm443, %v769, %v771
        %780 = vrot.lane.b32.xlu0 %v680, 112
        %v781 = vpop.permute.xlu0 %780
        %782 = vrot.lane.b32.xlu0 %v681, 112
        %v783 = vpop.permute.xlu0 %782
        %784 = vrot.lane.b32.xlu0 %v682, 112
        %v785 = vpop.permute.xlu0 %784
        %786 = vrot.lane.b32.xlu0 %v683, 112
        %v787 = vpop.permute.xlu0 %786
        %v788 = vsel %vm462, %v781, %v783
        %v789 = vsel %vm462, %v783, %v457
        %v790 = vsel %vm462, %v785, %v787
        %v791 = vsel %vm462, %v787, %v457
        %v796 = vsel %vm314, %v772, %v788
        %v797 = vsel %vm315, %v773, %v789
        %v798 = vsel %vm314, %v774, %v790
        %v799 = vsel %vm315, %v775, %v791
        %v800 = vsel %vm338, %v712, %v696
        %v801 = vsel %vm339, %v713, %v697
        %v802 = vsel %vm338, %v714, %v698
        %v803 = vsel %vm339, %v715, %v699
        %v804 = vsel %vm338, %v748, %v732
        %v805 = vsel %vm339, %v749, %v733
        %v806 = vsel %vm338, %v750, %v734
        %v807 = vsel %vm339, %v751, %v735
        %v808 = vsel %vm314, %v800, %v804
        %v809 = vsel %vm315, %v801, %v805
        %v810 = vsel %vm314, %v802, %v806
        %v811 = vsel %vm315, %v803, %v807
        %812 = vrot.lane.b32.xlu0 %v680, 1
        %v813 = vpop.permute.xlu0 %812
        %814 = vrot.lane.b32.xlu0 %v681, 1
        %v815 = vpop.permute.xlu0 %814
        %816 = vrot.lane.b32.xlu0 %v682, 1
        %v817 = vpop.permute.xlu0 %816
        %818 = vrot.lane.b32.xlu0 %v683, 1
        %v819 = vpop.permute.xlu0 %818
        %v820 = vsel %vm497, %v488, %v813
        %v821 = vsel %vm497, %v813, %v815
        %v822 = vsel %vm497, %v488, %v817
        %v823 = vsel %vm497, %v817, %v819
        %828 = vrot.lane.b32.xlu0 %v680, 127
        %v829 = vpop.permute.xlu0 %828
        %830 = vrot.lane.b32.xlu0 %v681, 127
        %v831 = vpop.permute.xlu0 %830
        %832 = vrot.lane.b32.xlu0 %v682, 127
        %v833 = vpop.permute.xlu0 %832
        %834 = vrot.lane.b32.xlu0 %v683, 127
        %v835 = vpop.permute.xlu0 %834
        %v836 = vsel %vm516, %v829, %v831
        %v837 = vsel %vm516, %v831, %v511
        %v838 = vsel %vm516, %v833, %v835
        %v839 = vsel %vm516, %v835, %v511
        %v844 = vsel %vm330, %v820, %v836
        %v845 = vsel %vm331, %v821, %v837
        %v846 = vsel %vm330, %v822, %v838
        %v847 = vsel %vm331, %v823, %v839
        %v848 = vsel %vm338, %v836, %v820
        %v849 = vsel %vm339, %v837, %v821
        %v850 = vsel %vm338, %v838, %v822
        %v851 = vsel %vm339, %v839, %v823
        %v852 = vsel %vm322, %v756, %v720
        %v853 = vsel %vm323, %v757, %v721
        %v854 = vsel %vm322, %v758, %v722
        %v855 = vsel %vm323, %v759, %v723
        %v856 = vsel %vm322, %v788, %v772
        %v857 = vsel %vm323, %v789, %v773
        %v858 = vsel %vm322, %v790, %v774
        %v859 = vsel %vm323, %v791, %v775
        %v860 = vsel %vm322, %v804, %v800
        %v861 = vsel %vm323, %v805, %v801
        %v862 = vsel %vm322, %v806, %v802
        %v863 = vsel %vm323, %v807, %v803
        %v864 = vld [vmem:[#allocation5] sm:$0xff]
        %v865 = vld [vmem:[#allocation5 + $0x8] sm:$0xff]
        %v866 = vld [vmem:[#allocation5 + $0x10] sm:$0xff]
        %v867 = vld [vmem:[#allocation5 + $0x18] sm:$0xff]
        %v868 = vld [vmem:[%s5] sm:$0xff]
        %v869 = vld [vmem:[%s5 + $0x8] sm:$0xff]
        %871 = vset.pattern.permute.xlu0 0
        %872 = vperm.xlu0 %871, %v868
        %v873 = vpop.permute.xlu0 %872
        %876 = vset.pattern.permute.xlu0 0
        %877 = vperm.xlu0 %876, %v869
        %v878 = vpop.permute.xlu0 %877
        %v881 = vsel %vm443, %v865, 0
        %v884 = vsel %vm443, %v867, 0
        %886 = vmatprep.subr.mxu0 %v761
        %887 = vmatpush1.msra.mxu0 %v760
        %888 = vmatprep.subr.mxu0 %v763
        %889 = vmatpush1.msra.mxu0 %v762
        %890 = vmatprep.subr.mxu0 %v797
        %891 = vmatpush1.msra.mxu0 %v796
        %892 = vmatprep.subr.mxu0 %v799
        %893 = vmatpush1.msra.mxu0 %v798
        %894 = vmatprep.subr.mxu0 %v809
        %895 = vmatpush1.msra.mxu0 %v808
        %896 = vmatprep.subr.mxu0 %v811
        %897 = vmatpush1.msra.mxu0 %v810
        %898 = vmatprep.subr.mxu0 %v845
        %899 = vmatpush1.msra.mxu0 %v844
        %900 = vmatprep.subr.mxu0 %v847
        %901 = vmatpush1.msra.mxu0 %v846
        %902 = vmatprep.subr.mxu0 %v681
        %903 = vmatpush1.msra.mxu0 %v680
        %904 = vmatprep.subr.mxu0 %v683
        %905 = vmatpush1.msra.mxu0 %v682
        %906 = vmatprep.subr.mxu0 %v849
        %907 = vmatpush1.msra.mxu0 %v848
        %908 = vmatprep.subr.mxu0 %v851
        %909 = vmatpush1.msra.mxu0 %v850
        %910 = vmatprep.subr.mxu0 %v853
        %911 = vmatpush1.msra.mxu0 %v852
        %912 = vmatprep.subr.mxu0 %v855
        %913 = vmatpush1.msra.mxu0 %v854
        %914 = vmatprep.subr.mxu0 %v857
        %915 = vmatpush1.msra.mxu0 %v856
        %916 = vmatprep.subr.mxu0 %v859
        %917 = vmatpush1.msra.mxu0 %v858
        %918 = vmatprep.subr.mxu0 %v861
        %919 = vmatpush1.msra.mxu0 %v860
        %920 = vmatprep.subr.mxu0 %v863
        %921 = vmatpush1.msra.mxu0 %v862
        %922 = vmatprep.subr.mxu0 0.0
        %923 = vmatpush1.msra.mxu0 0.0
        %924 = vmatprep.subr.mxu0 0.0
        %925 = vmatpush1.msra.mxu0 0.0
        %926 = vmatprep.subr.mxu0 0.0
        %927 = vmatpush1.msra.mxu0 0.0
        %928 = vmatprep.subr.mxu0 0.0
        %929 = vmatpush1.msra.mxu0 0.0
        %930 = vmatprep.subr.mxu0 0.0
        %931 = vmatpush1.msra.mxu0 0.0
        %932 = vmatprep.subr.mxu0 0.0
        %933 = vmatpush1.msra.mxu0 0.0
        %934 = vmatprep.subr.mxu0 0.0
        %935 = vmatpush1.msra.mxu0 0.0
        %936 = vmatprep.subr.mxu0 0.0
        %937 = vmatpush1.msra.mxu0 0.0
        %938 = vmatprep.subr.mxu0 0.0
        %939 = vmatpush1.msra.mxu0 0.0
        %940 = vmatprep.subr.mxu0 0.0
        %941 = vmatpush1.msra.mxu0 0.0
        %942 = vmatprep.subr.mxu0 0.0
        %943 = vmatpush1.msra.mxu0 0.0
        %944 = vmatprep.subr.mxu0 0.0
        %945 = vmatpush1.msra.mxu0 0.0
        %946 = vmatprep.subr.mxu0 0.0
        %947 = vmatpush1.msra.mxu0 0.0
        %948 = vmatprep.subr.mxu0 0.0
        %949 = vmatpush1.msra.mxu0 0.0
        %950 = vmatprep.mubr.f32.mxu0 %v881
        %951 = vmatmul.mubr.f32.gmra.mrb[0].mxu0 %v864
        %v952 = vpop.f32.mrb[0].mxu0
        %v953 = vadd.f32 %v873, %v952
        %v954 = vpop.f32.mrb[0].mxu0
        %v955 = vadd.f32 %v873, %v954
        %956 = vmatprep.mubr.f32.mxu0 %v884
        %957 = vmatmul.mubr.f32.gmra.mrb[0].mxu0 %v866
        %v958 = vpop.f32.mrb[0].mxu0
        %v959 = vadd.f32 %v878, %v958
        %v960 = vpop.f32.mrb[0].mxu0
        %v961 = vadd.f32 %v878, %v960
        %962 = vdwg.mxu0
        %v963 = vadd.f32 %v953, %v955
        %964 = vadd.xlane.f32.xlu0 %v963
        %v965 = vpop.xlane.xlu0 %964
        %v966 = vadd.f32 %v959, %v961
        %967 = vadd.xlane.f32.xlu0 %v966
        %v968 = vpop.xlane.xlu0 %967
        %v969 = vmul.f32 %v953, %v953
        %v970 = vmul.f32 %v955, %v955
        %v971 = vmul.f32 %v959, %v959
        %v972 = vmul.f32 %v961, %v961
        %v973 = vadd.f32 %v969, %v970
        %974 = vadd.xlane.f32.xlu0 %v973
        %v975 = vpop.xlane.xlu0 %974
        %v976 = vadd.f32 %v971, %v972
        %977 = vadd.xlane.f32.xlu0 %v976
        %v978 = vpop.xlane.xlu0 %977
        %v979 = vmul.f32 %v965, 0.00390625
        %v980 = vmul.f32 %v968, 0.00390625
        %v981 = vmul.f32 %v975, 0.00390625
        %v982 = vmul.f32 %v978, 0.00390625
        %v983 = vmul.f32 %v979, %v979
        %v984 = vmul.f32 %v980, %v980
        %v985 = vsub.f32 %v981, %v983
        %v986 = vsub.f32 %v982, %v984
        %v987 = vsub.f32 %v953, %v979
        %v988 = vsub.f32 %v955, %v979
        %v989 = vsub.f32 %v959, %v980
        %v990 = vsub.f32 %v961, %v980
        %v991 = vadd.f32 %v985, 1e-05
        %v992 = vadd.f32 %v986, 1e-05
        %v993 = vrsqrt.pop %v991
        %v994 = vrsqrt.pop %v992
        %v995 = vmul.f32 %v987, %v993
        %v996 = vmul.f32 %v988, %v993
        %v997 = vmul.f32 %v989, %v994
        %v998 = vmul.f32 %v990, %v994
        %v999 = vadd.f32 %v285, %v995
        %v1000 = vadd.f32 %v286, %v996
        %v1001 = vadd.f32 %v287, %v997
        %v1002 = vadd.f32 %v288, %v998
        %1003 = vst [vmem:[%s284] sm:$0xff] %v999
        %1004 = vst [vmem:[%s284 + $0x8] sm:$0xff] %v1000
        %1005 = vst [vmem:[%s284 + $0x10] sm:$0xff] %v1001
        %1006 = vst [vmem:[%s284 + $0x18] sm:$0xff] %v1002
        %s1007 = sand.u32 %s163, 1
        %s1008 = scalar_lea.sflag [#allocation4], %s1007
        %s1009 = sand.u32 %s163, 1
        %s1010 = smul.addr %s1009, 32
        %s1011 = scalar_lea.vmem [#allocation7], %s1010
        // Predicated region
        $region53: #{tpu_custom_call.1} parent=43 // pred_check
          %p1012 = pneg %p173
        $region54: #{tpu_custom_call.1} parent=43 // pred_check_branch
          %1014 = sbr.rel (%p1012) target = $region56
        $region55: #{tpu_custom_call.1} parent=43 // pred_region
          %s1016 = ssub.s32 512, 512
          %1017 = vsyncadd %s1008, %s1016
          %s1018 = smul.addr %s24, 4
          %s1019 = smul.addr %s1018, 128
          %s1020 = scalar_lea.hbm %s6, %s1019
          %s1021 = sshll.u32 %s1011, 4
          %s1022 = int_to_ptr.vmem [resolvable:$true] %s1021
          %1027 = dma.vmem_to_hbm [thread:$0]  %s1022, 512, %s1020, %s1008, 256, 256, 16
        $region56: #{tpu_custom_call.1} parent=43 // pred_fallthru
          _
      $region44: #{tpu_custom_call.1} parent=5 // pred_fallthru
        _
      %p1028 = scmp.le.s32.totalorder 2, %s19
      // Predicated region
      $region57: #{tpu_custom_call.1} parent=5 // pred_check
        %p1029 = pneg %p1028
      $region58: #{tpu_custom_call.1} parent=5 // pred_check_branch
        %1031 = sbr.rel (%p1029) target = $region60
      $region59: #{tpu_custom_call.1} parent=5 // pred_region
        %s1032 = ssub.s32 %s19, 2
        // Predicated region
        $region61: #{tpu_custom_call.1} parent=59 // pred_check
          %p1033 = pneg %p179
        $region62: #{tpu_custom_call.1} parent=59 // pred_check_branch
          %1035 = sbr.rel (%p1033) target = $region64
        $region63: #{tpu_custom_call.1} parent=59 // pred_region
          %s1036 = sand.u32 %s164, 1
          %s1037 = scalar_lea.sflag [#allocation4], %s1036
          %s1038 = sand.u32 %s164, 1
          %s1039 = smul.addr %s1038, 32
          %s1040 = scalar_lea.vmem [#allocation7], %s1039
          %1041 = dma.done %s1037, 512
        $region64: #{tpu_custom_call.1} parent=59 // pred_fallthru
          _
      $region60: #{tpu_custom_call.1} parent=5 // pred_fallthru
        _
    $region6: #{tpu_custom_call.1} parent=1 // loop_footer
      %s23 = sadd.s32 1, %s19
    $region7: #{tpu_custom_call.1} parent=1 // loop_footer_branch
      %18 = sbr.rel target = $region3
    $region8: #{tpu_custom_call.1} parent=1 // loop_exit
      _
    %1042 = vsyncpa [#allocation3], 1
    %s1043 = scalar_lea.sflag [#allocation3], 1
    %1044 = vsyncpa %s1043, 1
    %1045 = vsyncpa [#allocation6], 1
    %1046 = vsyncpa [#allocation4], 1
    %s1047 = scalar_lea.sflag [#allocation4], 1
    %1048 = vsyncpa %s1047, 1

</llo_original>
